<compile_context>
chip_gen: v6e
topology: v6e:2x2x1
jax: 0.10.0
libtpu: 0.0.40
codegen_flags: <defaults>
</compile_context>

<pallas_src>
import functools
import math

import jax
import jax.numpy as jnp
from jax.experimental import pallas as pl
from jax.experimental.pallas import tpu as pltpu

DEFAULT_HIDDEN_SIZE = 128
DEFAULT_NUM_HIDDEN_LAYERS = 1

_TARGET_CHUNK_ROWS = 1024      # ~ chunk*batch rows resident per GRU grid step
_MAX_GATHER_ROWS = 512         # rows emitted per embedding-gather grid step


def _round_up(x, m):
    return ((x + m - 1) // m) * m


def _vmem_limit(nbytes):
    # at least the v6e default (32 MiB), at most comfortably below physical
    return int(min(max(int(nbytes * 1.5) + (4 << 20), 32 << 20), 96 << 20))


# ----------------------------------------------------------------------------
# Embedding gather kernel (scalar-prefetch ids in SMEM, padded table in VMEM)
#   table3 : (V, 1, E_pad)  -- leading-axis indexable layout
#   out    : (N_pad, E_pad) -- lane-dense, stored as full (8, 128) tiles
# ----------------------------------------------------------------------------
def _embed_gather_kernel(ids_ref, emb_ref, out_ref, *, rows):
    base = pl.program_id(0) * rows

    def body(jj, carry):
        r0 = pl.multiple_of(jj * 8, 8)
        block = jnp.concatenate(
            [emb_ref[ids_ref[base + r0 + k]] for k in range(8)], axis=0)
        out_ref[pl.ds(r0, 8), :] = block.astype(out_ref.dtype)
        return carry

    jax.lax.fori_loop(0, rows // 8, body, 0, unroll=2)


def embedding_gather(ids, table3):
    """ids: (N,) int32 token ids; table3: (V, 1, E_pad)  ->  (N, E_pad)."""
    ids = jnp.asarray(ids, jnp.int32).reshape(-1)
    n = ids.shape[0]
    v, _, e_pad = table3.shape
    out_dtype = table3.dtype

    n8 = _round_up(n, 8)
    rows = min(_MAX_GATHER_ROWS, n8)
    n_pad = _round_up(n8, rows)
    if n_pad != n:
        ids = jnp.concatenate([ids, jnp.zeros((n_pad - n,), jnp.int32)])

    tsize = jnp.dtype(table3.dtype).itemsize
    osize = jnp.dtype(out_dtype).itemsize
    # (V,1,E_pad) pads the middle dim to 8 sublanes in VMEM -> the 8x factor.
    vmem_need = 2 * v * 8 * e_pad * tsize + 2 * rows * e_pad * osize
    bytes_accessed = int(n_pad * e_pad * (osize + tsize) + v * 8 * e_pad * tsize)

    out = pl.pallas_call(
        functools.partial(_embed_gather_kernel, rows=rows),
        out_shape=jax.ShapeDtypeStruct((n_pad, e_pad), out_dtype),
        grid_spec=pltpu.PrefetchScalarGridSpec(
            num_scalar_prefetch=1,
            grid=(n_pad // rows,),
            in_specs=[pl.BlockSpec((v, 1, e_pad), lambda i, ids_ref: (0, 0, 0))],
            out_specs=pl.BlockSpec((rows, e_pad), lambda i, ids_ref: (i, 0)),
        ),
        compiler_params=pltpu.CompilerParams(
            dimension_semantics=("parallel",),
            vmem_limit_bytes=_vmem_limit(vmem_need)),
        cost_estimate=pl.CostEstimate(flops=0, transcendentals=0,
                                      bytes_accessed=bytes_accessed),
    )(ids, table3)
    return out[:n]


# ----------------------------------------------------------------------------
# GRU layer kernel.
#   grid = (num_dirs, num_chunks); chunk axis is "arbitrary" (sequential).
#   x_ref : (CHUNK*B, E)   time-major slab of the current chunk
#   out   : (CHUNK*B, H)   direction d writes columns [d*H : (d+1)*H]
#   gi_ref: (CHUNK*B, 3H)  f32 scratch  (hoisted input projection)
#   h_ref : (B, H)         f32 carry across chunks
# ----------------------------------------------------------------------------
def _gru_layer_kernel(x_ref, wih_ref, whh_ref, bih_ref, bhh_ref,
                      out_ref, gi_ref, h_ref,
                      *, hidden, batch, chunk, nc, seq_real):
    H = hidden
    d = pl.program_id(0)                      # 0 = forward, 1 = backward
    c = pl.program_id(1)                      # chunk iteration counter
    cc = c * (1 - d) + (nc - 1 - c) * d       # effective chunk (time order)

    @pl.when(c == 0)
    def _():
        h_ref[...] = jnp.zeros_like(h_ref)

    w_ih = wih_ref[0]                         # (E, 3H)  compute dtype
    w_hh = whh_ref[0]                         # (H, 3H)  compute dtype
    b_ih = bih_ref[0].astype(jnp.float32)     # (1, 3H)
    b_hh = bhh_ref[0].astype(jnp.float32)     # (1, 3H)

    # Hoisted per-chunk input projection: one (CHUNK*B, E) @ (E, 3H) matmul.
    gi_ref[...] = (jnp.dot(x_ref[...], w_ih, preferred_element_type=jnp.float32)
                   + b_ih)

    # Hoist the recurrent-bias broadcast out of the time loop (no CSE in JAX).
    bhh_b = jnp.broadcast_to(b_hh, (batch, 3 * H))

    def step(i, h):
        # forward scans t = 0..chunk-1 within the chunk; backward reverses.
        t = jnp.where(d == 0, i, chunk - 1 - i)
        t_abs = cc * chunk + t
        row = pl.multiple_of(t * batch, 8)
        g = gi_ref[pl.ds(row, batch), :]                            # (B,3H) f32
        gh = jnp.dot(h.astype(w_hh.dtype), w_hh,
                     preferred_element_type=jnp.float32) + bhh_b    # (B,3H) f32
        r = jax.nn.sigmoid(g[:, 0:H] + gh[:, 0:H])
        z = jax.nn.sigmoid(g[:, H:2 * H] + gh[:, H:2 * H])
        n = jnp.tanh(g[:, 2 * H:3 * H] + r * gh[:, 2 * H:3 * H])
        h_new = (1.0 - z) * n + z * h
        # Mask time-padding steps so the backward carry stays exact.
        h_new = jnp.where(t_abs < seq_real, h_new, h)
        out_ref[pl.ds(row, batch), :] = h_new.astype(out_ref.dtype)
        return h_new

    h_ref[...] = jax.lax.fori_loop(0, chunk, step, h_ref[...],
                                   unroll=(True if chunk <= 8 else 2))


def gru_layer(x_flat, w_ih, w_hh, b_ih, b_hh, *, batch, seq_real, chunk,
              out_dtype):
    """x_flat: (T_pad*B, E) time-major; weights stacked (D, E, 3H)/(D, H, 3H)."""
    compute_dtype = w_ih.dtype
    x_flat = x_flat.astype(compute_dtype)
    n_rows, in_dim = x_flat.shape
    num_dirs, _, three_h = w_ih.shape
    hid = three_h // 3
    seq_pad = n_rows // batch
    chunk = max(1, min(chunk, seq_pad))
    assert seq_pad % chunk == 0, "padded sequence length must be a multiple of chunk"
    nc = seq_pad // chunk
    blk_rows = chunk * batch

    def eff(d, c):  # effective (time-ordered) chunk index per direction
        return c * (1 - d) + (nc - 1 - c) * d

    column_packed = (num_dirs == 1) or (hid % 128 == 0)
    if column_packed:  # fast path: lane-aligned column blocks, no concat
        out_shape = jax.ShapeDtypeStruct((n_rows, num_dirs * hid), out_dtype)
        out_spec = pl.BlockSpec((blk_rows, hid), lambda d, c: (eff(d, c), d))
    else:              # unaligned hidden sizes: per-direction slabs, merged after
        out_shape = jax.ShapeDtypeStruct((num_dirs, n_rows, hid), out_dtype)
        out_spec = pl.BlockSpec((None, blk_rows, hid),
                                lambda d, c: (d, eff(d, c), 0))

    csize = jnp.dtype(compute_dtype).itemsize
    osize = jnp.dtype(out_dtype).itemsize

    flops = int(num_dirs * (2 * n_rows * in_dim * three_h
                            + 2 * n_rows * hid * three_h
                            + 10 * n_rows * hid))
    transcendentals = int(num_dirs * 3 * n_rows * hid)
    bytes_accessed = int(num_dirs * n_rows * in_dim * csize
                         + num_dirs * ((in_dim + hid) * three_h * csize
                                       + 2 * three_h * 4)
                         + n_rows * num_dirs * hid * osize)

    # VMEM budget: double-buffered pipeline blocks + persistent scratch.
    vmem_need = (2 * blk_rows * in_dim * csize            # x block
                 + 2 * blk_rows * hid * osize             # out block
                 + 2 * (in_dim + hid) * three_h * csize   # weights
                 + 2 * 2 * three_h * 4                    # biases
                 + blk_rows * three_h * 4                 # gi scratch
                 + batch * hid * 4)                       # h carry

    out = pl.pallas_call(
        functools.partial(_gru_layer_kernel, hidden=hid, batch=batch,
                          chunk=chunk, nc=nc, seq_real=seq_real),
        out_shape=out_shape,
        grid_spec=pltpu.PrefetchScalarGridSpec(
            num_scalar_prefetch=0,
            grid=(num_dirs, nc),
            in_specs=[
                pl.BlockSpec((blk_rows, in_dim), lambda d, c: (eff(d, c), 0)),
                pl.BlockSpec((1, in_dim, three_h), lambda d, c: (d, 0, 0)),
                pl.BlockSpec((1, hid, three_h), lambda d, c: (d, 0, 0)),
                pl.BlockSpec((1, 1, three_h), lambda d, c: (d, 0, 0)),
                pl.BlockSpec((1, 1, three_h), lambda d, c: (d, 0, 0)),
            ],
            out_specs=out_spec,
            scratch_shapes=[pltpu.VMEM((blk_rows, three_h), jnp.float32),
                            pltpu.VMEM((batch, hid), jnp.float32)],
        ),
        compiler_params=pltpu.CompilerParams(
            dimension_semantics=("parallel", "arbitrary"),
            vmem_limit_bytes=_vmem_limit(vmem_need)),
        cost_estimate=pl.CostEstimate(flops=flops,
                                      transcendentals=transcendentals,
                                      bytes_accessed=bytes_accessed),
    )(x_flat, w_ih, w_hh, b_ih, b_hh)

    if not column_packed:
        out = jnp.transpose(out, (1, 0, 2)).reshape(n_rows, num_dirs * hid)
    return out


# ----------------------------------------------------------------------------
# BaseRNN
# ----------------------------------------------------------------------------
class BaseRNNPallas:
    def __init__(self, embedding, bidirectional,
                 hidden_size=DEFAULT_HIDDEN_SIZE,
                 num_hidden_layers=DEFAULT_NUM_HIDDEN_LAYERS,
                 compute_dtype=jnp.bfloat16, time_chunk=None,
                 key=jax.random.PRNGKey(0)):
        embedding = jnp.asarray(embedding, jnp.float32)
        self.vocab_size, self.embedding_dim = embedding.shape
        self.hidden_size = hidden_size
        self.bidirectional = bidirectional
        self.num_hidden_layers = num_hidden_layers
        self.compute_dtype = jnp.dtype(compute_dtype)
        self.time_chunk = time_chunk
        self.embedding = embedding

        # Pad E to a multiple of 128 (lane-dense gather; zero weight rows make
        # the padding free for the GRU input projection).
        self.emb_dim_pad = _round_up(self.embedding_dim, 128)
        emb_pad = jnp.zeros((self.vocab_size, self.emb_dim_pad), jnp.float32)
        emb_pad = emb_pad.at[:, :self.embedding_dim].set(embedding)
        self.emb_pad_f32 = emb_pad.reshape(self.vocab_size, 1, self.emb_dim_pad)
        self.emb_pad_compute = (self.emb_pad_f32
                                if self.compute_dtype == jnp.dtype(jnp.float32)
                                else self.emb_pad_f32.astype(self.compute_dtype))

        num_dirs = 2 if bidirectional else 1
        self.num_dirs = num_dirs
        bound = 1.0 / math.sqrt(hidden_size)        # torch.nn.GRU init range
        self.layers = []
        for layer in range(num_hidden_layers):
            in_dim = self.emb_dim_pad if layer == 0 else hidden_size * num_dirs
            real_in = self.embedding_dim if layer == 0 else in_dim
            key, k1, k2, k3, k4 = jax.random.split(key, 5)
            w_ih = jnp.zeros((num_dirs, in_dim, 3 * hidden_size), jnp.float32)
            w_ih = w_ih.at[:, :real_in, :].set(
                jax.random.uniform(k1, (num_dirs, real_in, 3 * hidden_size),
                                   jnp.float32, -bound, bound))
            w_hh = jax.random.uniform(k2, (num_dirs, hidden_size, 3 * hidden_size),
                                      jnp.float32, -bound, bound)
            b_ih = jax.random.uniform(k3, (num_dirs, 1, 3 * hidden_size),
                                      jnp.float32, -bound, bound)
            b_hh = jax.random.uniform(k4, (num_dirs, 1, 3 * hidden_size),
                                      jnp.float32, -bound, bound)
            self.layers.append((w_ih.astype(self.compute_dtype),
                                w_hh.astype(self.compute_dtype),
                                b_ih, b_hh))            # biases stay f32

    def embedding_lookup(self, x, input_lengths=None):
        x = jnp.asarray(x, jnp.int32)
        bsz, seq = x.shape
        flat = embedding_gather(x.reshape(-1), self.emb_pad_f32)
        return flat[:, :self.embedding_dim].reshape(bsz, seq, self.embedding_dim)

    def forward(self, x, input_lengths=None):
        # TODO(synk): input_lengths (packed-sequence masking) is ignored.
        x = jnp.asarray(x, jnp.int32)
        bsz, seq = x.shape
        b_pad = max(8, _round_up(bsz, 8))              # pad batch to sublanes
        if self.time_chunk is not None:
            chunk = max(1, min(self.time_chunk, seq))
        else:
            chunk = max(1, min(seq, _TARGET_CHUNK_ROWS // b_pad))
        seq_pad = _round_up(seq, chunk)

        x_p = jnp.zeros((b_pad, seq_pad), jnp.int32).at[:bsz, :seq].set(x)
        ids_tmajor = x_p.T.reshape(-1)                 # (T_pad * B_pad,), time-major
        h = embedding_gather(ids_tmajor, self.emb_pad_compute)  # (T_pad*B_pad, E_pad)

        for li, (w_ih, w_hh, b_ih, b_hh) in enumerate(self.layers):
            last = (li == len(self.layers) - 1)
            h = gru_layer(h, w_ih, w_hh, b_ih, b_hh,
                          batch=b_pad, seq_real=seq, chunk=chunk,
                          out_dtype=(jnp.float32 if last else self.compute_dtype))

        out = h.reshape(seq_pad, b_pad, -1)            # (T_pad, B_pad, D*H)
        # TODO(synk): write batch-major directly from the kernel to drop this
        # transpose (trades lane-dense in-kernel stores for it).
        out = jnp.transpose(out, (1, 0, 2))[:bsz, :seq]
        return out.astype(jnp.float32)


# ----------------------------------------------------------------------------
# Pure-JAX reference (mirrors the kernel's dtype choices for tight comparison)
# ----------------------------------------------------------------------------
def _ref_gru_layer(x_tbe, w_ih, w_hh, b_ih, b_hh):
    num_dirs = w_ih.shape[0]
    H = w_hh.shape[1]
    cdt = w_ih.dtype
    outs = []
    for d in range(num_dirs):
        xs = x_tbe if d == 0 else x_tbe[::-1]

        def step(h, xt, d=d):
            gi = jnp.dot(xt.astype(cdt), w_ih[d],
                         preferred_element_type=jnp.float32) + b_ih[d]
            gh = jnp.dot(h.astype(cdt), w_hh[d],
                         preferred_element_type=jnp.float32) + b_hh[d]
            r = jax.nn.sigmoid(gi[:, :H] + gh[:, :H])
            z = jax.nn.sigmoid(gi[:, H:2 * H] + gh[:, H:2 * H])
            n = jnp.tanh(gi[:, 2 * H:] + r * gh[:, 2 * H:])
            h_new = (1.0 - z) * n + z * h
            return h_new, h_new

        _, ys = jax.lax.scan(step, jnp.zeros((xs.shape[1], H), jnp.float32), xs)
        if d == 1:
            ys = ys[::-1]
        outs.append(ys)
    return jnp.concatenate(outs, axis=-1)


def _ref_forward(model, x):
    table = model.emb_pad_f32.reshape(model.vocab_size, model.emb_dim_pad)
    h = jnp.transpose(table[x], (1, 0, 2))             # (T, B, E_pad)
    for w in model.layers:
        h = _ref_gru_layer(h, *w)
    return jnp.transpose(h, (1, 0, 2))                 # (B, T, D*H)


if __name__ == "__main__":
    key = jax.random.PRNGKey(0)
    k_emb, k_x, k_m1, k_m2 = jax.random.split(key, 4)

    VOCAB, EMB_DIM, HIDDEN = 16, 32, 128
    B, T = 2, 8

    embedding = jax.random.normal(k_emb, (VOCAB, EMB_DIM), jnp.float32)
    x = jax.random.randint(k_x, (B, T), 0, VOCAB, jnp.int32)

    # --- bidirectional, 1 layer, f32 compute, time_chunk=3 (exercises the
    #     chunked grid, reversed backward chunk order and time-pad masking) ---
    model = BaseRNNPallas(embedding, bidirectional=True, hidden_size=HIDDEN,
                          num_hidden_layers=1, compute_dtype=jnp.float32,
                          time_chunk=3, key=k_m1)
    emb_out = jax.block_until_ready(model.embedding_lookup(x))
    assert emb_out.shape == (B, T, EMB_DIM), emb_out.shape
    assert jnp.allclose(emb_out, embedding[x], atol=1e-6), "embedding gather"

    out = jax.block_until_ready(model.forward(x))
    assert out.shape == (B, T, 2 * HIDDEN), out.shape
    ref = jax.block_until_ready(_ref_forward(model, x))
    err = float(jnp.max(jnp.abs(out - ref)))
    assert err < 2e-3, err

    # --- unidirectional, 2 layers, bf16 compute (default), auto chunk ---
    model2 = BaseRNNPallas(embedding, bidirectional=False, hidden_size=HIDDEN,
                           num_hidden_layers=2, key=k_m2)
    out2 = jax.block_until_ready(model2.forward(x))
    assert out2.shape == (B, T, HIDDEN), out2.shape
    ref2 = jax.block_until_ready(_ref_forward(model2, x))
    err2 = float(jnp.max(jnp.abs(out2 - ref2)))
    assert err2 < 5e-3, err2

    print("KERNEL_OK")
</pallas_src>

<mosaic_0001>
module attributes {stable_mosaic.version = 11 : i64} {
  func.func @_embed_gather_kernel(%arg0: i32, %arg1: memref<16xi32, #tpu.memory_space<smem>>, %arg2: memref<16x1x128xf32, #tpu.memory_space<vmem>>, %arg3: memref<16x128xf32, #tpu.memory_space<vmem>>) attributes {dimension_semantics = [#tpu.dimension_semantics<parallel>], iteration_bounds = array<i64: 1>, scalar_prefetch = 1 : i64, scratch_operands = 0 : i64, tpu.core_type = #tpu.core_type<tc>, window_params = [{pipeline_mode = #tpu.pipeline_mode<synchronous>, transform_indices = @transform_0, window_bounds = array<i64: 16, 1, 128>}, {transform_indices = @transform_1, window_bounds = array<i64: 16, 128>}]} {
    %c16_i32 = arith.constant 16 : i32
    %0 = arith.muli %arg0, %c16_i32 : i32
    %c0_i32 = arith.constant 0 : i32
    %c8_i32 = arith.constant 8 : i32
    %1 = arith.muli %c0_i32, %c8_i32 : i32
    %2 = tpu.assume_multiple %1, 8 : i32
    %3 = arith.addi %0, %2 : i32
    %c0_i32_0 = arith.constant 0 : i32
    %4 = arith.addi %3, %c0_i32_0 : i32
    %5 = arith.index_cast %4 : i32 to index
    %6 = memref.load %arg1[%5] : memref<16xi32, #tpu.memory_space<smem>>
    %7 = arith.index_cast %6 : i32 to index
    %c0 = arith.constant 0 : index
    %c0_1 = arith.constant 0 : index
    %8 = vector.load %arg2[%7, %c0, %c0_1] : memref<16x1x128xf32, #tpu.memory_space<vmem>>, vector<1x1x128xf32>
    %9 = vector.shape_cast %8 : vector<1x1x128xf32> to vector<1x128xf32>
    %10 = arith.addi %0, %2 : i32
    %c1_i32 = arith.constant 1 : i32
    %11 = arith.addi %10, %c1_i32 : i32
    %12 = arith.index_cast %11 : i32 to index
    %13 = memref.load %arg1[%12] : memref<16xi32, #tpu.memory_space<smem>>
    %14 = arith.index_cast %13 : i32 to index
    %c0_2 = arith.constant 0 : index
    %c0_3 = arith.constant 0 : index
    %15 = vector.load %arg2[%14, %c0_2, %c0_3] : memref<16x1x128xf32, #tpu.memory_space<vmem>>, vector<1x1x128xf32>
    %16 = vector.shape_cast %15 : vector<1x1x128xf32> to vector<1x128xf32>
    %17 = arith.addi %0, %2 : i32
    %c2_i32 = arith.constant 2 : i32
    %18 = arith.addi %17, %c2_i32 : i32
    %19 = arith.index_cast %18 : i32 to index
    %20 = memref.load %arg1[%19] : memref<16xi32, #tpu.memory_space<smem>>
    %21 = arith.index_cast %20 : i32 to index
    %c0_4 = arith.constant 0 : index
    %c0_5 = arith.constant 0 : index
    %22 = vector.load %arg2[%21, %c0_4, %c0_5] : memref<16x1x128xf32, #tpu.memory_space<vmem>>, vector<1x1x128xf32>
    %23 = vector.shape_cast %22 : vector<1x1x128xf32> to vector<1x128xf32>
    %24 = arith.addi %0, %2 : i32
    %c3_i32 = arith.constant 3 : i32
    %25 = arith.addi %24, %c3_i32 : i32
    %26 = arith.index_cast %25 : i32 to index
    %27 = memref.load %arg1[%26] : memref<16xi32, #tpu.memory_space<smem>>
    %28 = arith.index_cast %27 : i32 to index
    %c0_6 = arith.constant 0 : index
    %c0_7 = arith.constant 0 : index
    %29 = vector.load %arg2[%28, %c0_6, %c0_7] : memref<16x1x128xf32, #tpu.memory_space<vmem>>, vector<1x1x128xf32>
    %30 = vector.shape_cast %29 : vector<1x1x128xf32> to vector<1x128xf32>
    %31 = arith.addi %0, %2 : i32
    %c4_i32 = arith.constant 4 : i32
    %32 = arith.addi %31, %c4_i32 : i32
    %33 = arith.index_cast %32 : i32 to index
    %34 = memref.load %arg1[%33] : memref<16xi32, #tpu.memory_space<smem>>
    %35 = arith.index_cast %34 : i32 to index
    %c0_8 = arith.constant 0 : index
    %c0_9 = arith.constant 0 : index
    %36 = vector.load %arg2[%35, %c0_8, %c0_9] : memref<16x1x128xf32, #tpu.memory_space<vmem>>, vector<1x1x128xf32>
    %37 = vector.shape_cast %36 : vector<1x1x128xf32> to vector<1x128xf32>
    %38 = arith.addi %0, %2 : i32
    %c5_i32 = arith.constant 5 : i32
    %39 = arith.addi %38, %c5_i32 : i32
    %40 = arith.index_cast %39 : i32 to index
    %41 = memref.load %arg1[%40] : memref<16xi32, #tpu.memory_space<smem>>
    %42 = arith.index_cast %41 : i32 to index
    %c0_10 = arith.constant 0 : index
    %c0_11 = arith.constant 0 : index
    %43 = vector.load %arg2[%42, %c0_10, %c0_11] : memref<16x1x128xf32, #tpu.memory_space<vmem>>, vector<1x1x128xf32>
    %44 = vector.shape_cast %43 : vector<1x1x128xf32> to vector<1x128xf32>
    %45 = arith.addi %0, %2 : i32
    %c6_i32 = arith.constant 6 : i32
    %46 = arith.addi %45, %c6_i32 : i32
    %47 = arith.index_cast %46 : i32 to index
    %48 = memref.load %arg1[%47] : memref<16xi32, #tpu.memory_space<smem>>
    %49 = arith.index_cast %48 : i32 to index
    %c0_12 = arith.constant 0 : index
    %c0_13 = arith.constant 0 : index
    %50 = vector.load %arg2[%49, %c0_12, %c0_13] : memref<16x1x128xf32, #tpu.memory_space<vmem>>, vector<1x1x128xf32>
    %51 = vector.shape_cast %50 : vector<1x1x128xf32> to vector<1x128xf32>
    %52 = arith.addi %0, %2 : i32
    %c7_i32 = arith.constant 7 : i32
    %53 = arith.addi %52, %c7_i32 : i32
    %54 = arith.index_cast %53 : i32 to index
    %55 = memref.load %arg1[%54] : memref<16xi32, #tpu.memory_space<smem>>
    %56 = arith.index_cast %55 : i32 to index
    %c0_14 = arith.constant 0 : index
    %c0_15 = arith.constant 0 : index
    %57 = vector.load %arg2[%56, %c0_14, %c0_15] : memref<16x1x128xf32, #tpu.memory_space<vmem>>, vector<1x1x128xf32>
    %58 = vector.shape_cast %57 : vector<1x1x128xf32> to vector<1x128xf32>
    %59 = tpu.concatenate %9, %16, %23, %30, %37, %44, %51, %58 in 0 : vector<1x128xf32>, vector<1x128xf32>, vector<1x128xf32>, vector<1x128xf32>, vector<1x128xf32>, vector<1x128xf32>, vector<1x128xf32>, vector<1x128xf32> -> vector<8x128xf32>
    %60 = arith.index_cast %2 : i32 to index
    %c0_16 = arith.constant 0 : index
    %61 = vector.load %arg3[%60, %c0_16] : memref<16x128xf32, #tpu.memory_space<vmem>>, vector<8x128xf32>
    tpu.vector_store %arg3[%60, %c0_16], %59 {strides = array<i32>} : memref<16x128xf32, #tpu.memory_space<vmem>>, vector<8x128xf32>,
    %c1_i32_17 = arith.constant 1 : i32
    %c8_i32_18 = arith.constant 8 : i32
    %62 = arith.muli %c1_i32_17, %c8_i32_18 : i32
    %63 = tpu.assume_multiple %62, 8 : i32
    %64 = arith.addi %0, %63 : i32
    %c0_i32_19 = arith.constant 0 : i32
    %65 = arith.addi %64, %c0_i32_19 : i32
    %66 = arith.index_cast %65 : i32 to index
    %67 = memref.load %arg1[%66] : memref<16xi32, #tpu.memory_space<smem>>
    %68 = arith.index_cast %67 : i32 to index
    %c0_20 = arith.constant 0 : index
    %c0_21 = arith.constant 0 : index
    %69 = vector.load %arg2[%68, %c0_20, %c0_21] : memref<16x1x128xf32, #tpu.memory_space<vmem>>, vector<1x1x128xf32>
    %70 = vector.shape_cast %69 : vector<1x1x128xf32> to vector<1x128xf32>
    %71 = arith.addi %0, %63 : i32
    %c1_i32_22 = arith.constant 1 : i32
    %72 = arith.addi %71, %c1_i32_22 : i32
    %73 = arith.index_cast %72 : i32 to index
    %74 = memref.load %arg1[%73] : memref<16xi32, #tpu.memory_space<smem>>
    %75 = arith.index_cast %74 : i32 to index
    %c0_23 = arith.constant 0 : index
    %c0_24 = arith.constant 0 : index
    %76 = vector.load %arg2[%75, %c0_23, %c0_24] : memref<16x1x128xf32, #tpu.memory_space<vmem>>, vector<1x1x128xf32>
    %77 = vector.shape_cast %76 : vector<1x1x128xf32> to vector<1x128xf32>
    %78 = arith.addi %0, %63 : i32
    %c2_i32_25 = arith.constant 2 : i32
    %79 = arith.addi %78, %c2_i32_25 : i32
    %80 = arith.index_cast %79 : i32 to index
    %81 = memref.load %arg1[%80] : memref<16xi32, #tpu.memory_space<smem>>
    %82 = arith.index_cast %81 : i32 to index
    %c0_26 = arith.constant 0 : index
    %c0_27 = arith.constant 0 : index
    %83 = vector.load %arg2[%82, %c0_26, %c0_27] : memref<16x1x128xf32, #tpu.memory_space<vmem>>, vector<1x1x128xf32>
    %84 = vector.shape_cast %83 : vector<1x1x128xf32> to vector<1x128xf32>
    %85 = arith.addi %0, %63 : i32
    %c3_i32_28 = arith.constant 3 : i32
    %86 = arith.addi %85, %c3_i32_28 : i32
    %87 = arith.index_cast %86 : i32 to index
    %88 = memref.load %arg1[%87] : memref<16xi32, #tpu.memory_space<smem>>
    %89 = arith.index_cast %88 : i32 to index
    %c0_29 = arith.constant 0 : index
    %c0_30 = arith.constant 0 : index
    %90 = vector.load %arg2[%89, %c0_29, %c0_30] : memref<16x1x128xf32, #tpu.memory_space<vmem>>, vector<1x1x128xf32>
    %91 = vector.shape_cast %90 : vector<1x1x128xf32> to vector<1x128xf32>
    %92 = arith.addi %0, %63 : i32
    %c4_i32_31 = arith.constant 4 : i32
    %93 = arith.addi %92, %c4_i32_31 : i32
    %94 = arith.index_cast %93 : i32 to index
    %95 = memref.load %arg1[%94] : memref<16xi32, #tpu.memory_space<smem>>
    %96 = arith.index_cast %95 : i32 to index
    %c0_32 = arith.constant 0 : index
    %c0_33 = arith.constant 0 : index
    %97 = vector.load %arg2[%96, %c0_32, %c0_33] : memref<16x1x128xf32, #tpu.memory_space<vmem>>, vector<1x1x128xf32>
    %98 = vector.shape_cast %97 : vector<1x1x128xf32> to vector<1x128xf32>
    %99 = arith.addi %0, %63 : i32
    %c5_i32_34 = arith.constant 5 : i32
    %100 = arith.addi %99, %c5_i32_34 : i32
    %101 = arith.index_cast %100 : i32 to index
    %102 = memref.load %arg1[%101] : memref<16xi32, #tpu.memory_space<smem>>
    %103 = arith.index_cast %102 : i32 to index
    %c0_35 = arith.constant 0 : index
    %c0_36 = arith.constant 0 : index
    %104 = vector.load %arg2[%103, %c0_35, %c0_36] : memref<16x1x128xf32, #tpu.memory_space<vmem>>, vector<1x1x128xf32>
    %105 = vector.shape_cast %104 : vector<1x1x128xf32> to vector<1x128xf32>
    %106 = arith.addi %0, %63 : i32
    %c6_i32_37 = arith.constant 6 : i32
    %107 = arith.addi %106, %c6_i32_37 : i32
    %108 = arith.index_cast %107 : i32 to index
    %109 = memref.load %arg1[%108] : memref<16xi32, #tpu.memory_space<smem>>
    %110 = arith.index_cast %109 : i32 to index
    %c0_38 = arith.constant 0 : index
    %c0_39 = arith.constant 0 : index
    %111 = vector.load %arg2[%110, %c0_38, %c0_39] : memref<16x1x128xf32, #tpu.memory_space<vmem>>, vector<1x1x128xf32>
    %112 = vector.shape_cast %111 : vector<1x1x128xf32> to vector<1x128xf32>
    %113 = arith.addi %0, %63 : i32
    %c7_i32_40 = arith.constant 7 : i32
    %114 = arith.addi %113, %c7_i32_40 : i32
    %115 = arith.index_cast %114 : i32 to index
    %116 = memref.load %arg1[%115] : memref<16xi32, #tpu.memory_space<smem>>
    %117 = arith.index_cast %116 : i32 to index
    %c0_41 = arith.constant 0 : index
    %c0_42 = arith.constant 0 : index
    %118 = vector.load %arg2[%117, %c0_41, %c0_42] : memref<16x1x128xf32, #tpu.memory_space<vmem>>, vector<1x1x128xf32>
    %119 = vector.shape_cast %118 : vector<1x1x128xf32> to vector<1x128xf32>
    %120 = tpu.concatenate %70, %77, %84, %91, %98, %105, %112, %119 in 0 : vector<1x128xf32>, vector<1x128xf32>, vector<1x128xf32>, vector<1x128xf32>, vector<1x128xf32>, vector<1x128xf32>, vector<1x128xf32>, vector<1x128xf32> -> vector<8x128xf32>
    %121 = arith.index_cast %63 : i32 to index
    %c0_43 = arith.constant 0 : index
    %122 = vector.load %arg3[%121, %c0_43] : memref<16x128xf32, #tpu.memory_space<vmem>>, vector<8x128xf32>
    tpu.vector_store %arg3[%121, %c0_43], %120 {strides = array<i32>} : memref<16x128xf32, #tpu.memory_space<vmem>>, vector<8x128xf32>,
    %c2_i32_44 = arith.constant 2 : i32
    return
  }
  func.func @transform_0(%arg0: i32, %arg1: memref<16xi32, #tpu.memory_space<smem>>) -> (i32, i32, i32) {
    %c0_i32 = arith.constant 0 : i32
    %c0_i32_0 = arith.constant 0 : i32
    %c0_i32_1 = arith.constant 0 : i32
    %c0_i32_2 = arith.constant 0 : i32
    return %c0_i32, %c0_i32_0, %c0_i32_1 : i32, i32, i32
  }
  func.func @transform_1(%arg0: i32, %arg1: memref<16xi32, #tpu.memory_space<smem>>) -> (i32, i32) {
    %c0_i32 = arith.constant 0 : i32
    %c0_i32_0 = arith.constant 0 : i32
    return %arg0, %c0_i32 : i32, i32
  }
}

</mosaic_0001>

<llo_original>
// kernel: tpu_custom_call.1
$region0: #{tpu_custom_call.1}
  #allocation0 [shape = 'u32[]', space=smem, size = 0x4, offset = 0x4, fixed_abs, tag = 'smem constant byte address 0x4 - core index']
  #allocation1 [shape = 'u32[144,128]{1,0:T(1,128)}', space=vmem, size = 0x12000, scoped, tag = 'internal scratch']
  #allocation2 [shape = 's32[1]{0}', space=sflag, size = 0x4, scoped, tag = 'scoped memory for tpu_custom_call.1']
  #allocation3 [shape = 'u8[512]{0}', space=smem, size = 0x200, scoped, tag = 'prefetched SMEM operand 0']
  %s0 = inlined_call_operand.hbm [shape: s32[16], index: 0, kind: input, shape index: {}]
  %s1 = inlined_call_operand.hbm [shape: f32[16,1,128], index: 1, kind: input, shape index: {}]
  %s2 = inlined_call_operand.hbm [shape: f32[16,128], index: 2, kind: output, shape index: {}]
  %s3 = sld [smem:[#allocation0]]
  $region18: #{tpu_custom_call.1} parent=0
    _
  %s5 = ssub.s32 1, %s3
  %s6 = scalar_select 0, %s5, %s3
  %8 = dma.hbm_to_smem %s0, 16, [#allocation3], [#allocation2]
  %9 = dma.done [#allocation2], 16
  %10 = sfence
  $region1: #{tpu_custom_call.1} parent=0
    #allocation4 [shape = 'u8[8192]{0}', space=vmem, size = 0x2000, scoped, tag = 'input window, operand 1, single buffered']
    #allocation5 [shape = 's32[1]{0}', space=sflag, size = 0x4, scoped, tag = 'scoped memory for tpu_custom_call.1']
    #allocation6 [shape = 's32[1]{0}', space=sflag, size = 0x4, scoped, tag = 'scoped memory for tpu_custom_call.1']
    #allocation7 [shape = 'u8[8192]{0}', space=vmem, size = 0x2000, scoped, tag = 'output window, operand 0, single buffered']
    %11 = vsyncpa [#allocation5], 0
    %12 = vsyncpa [#allocation6], 0
    // Predicated region
    $region2: #{tpu_custom_call.1} parent=1 // pred_check
      _
    $region3: #{tpu_custom_call.1} parent=1 // pred_check_branch
      %14 = sbr.rel (0) target = $region5
    $region4: #{tpu_custom_call.1} parent=1 // pred_region
      %s16 = ssub.s32 256, 256
      %17 = vsyncadd [#allocation5], %s16
      %s18 = sshll.u32 [#allocation4], 4
      %s19 = int_to_ptr.vmem [resolvable:$true] %s18
      %24 = dma.hbm_to_vmem [thread:$0]  %s1, 256, %s19, [#allocation5], 16, 16, 1
    $region5: #{tpu_custom_call.1} parent=1 // pred_fallthru
      _
    // Predicated region
    $region6: #{tpu_custom_call.1} parent=1 // pred_check
      _
    $region7: #{tpu_custom_call.1} parent=1 // pred_check_branch
      %26 = sbr.rel (0) target = $region9
    $region8: #{tpu_custom_call.1} parent=1 // pred_region
      %27 = dma.done [#allocation5], 256
    $region9: #{tpu_custom_call.1} parent=1 // pred_fallthru
      _
    %s28 = smul.u32 0, 16
    %s29 = sadd.s32 %s28, 0
    %s30 = sld [smem:[#allocation3 + %s29]]
    %s31 = scalar_lea.vmem [#allocation4], %s30
    %v32 = vld [vmem:[%s31] sm:$0x1]
    %s33 = sadd.s32 %s29, 1
    %s34 = sld [smem:[#allocation3 + %s33]]
    %s35 = scalar_lea.vmem [#allocation4], %s34
    %v36 = vld [vmem:[%s35] sm:$0x1]
    %s37 = sadd.s32 %s29, 2
    %s38 = sld [smem:[#allocation3 + %s37]]
    %s39 = scalar_lea.vmem [#allocation4], %s38
    %v40 = vld [vmem:[%s39] sm:$0x1]
    %s41 = sadd.s32 %s29, 3
    %s42 = sld [smem:[#allocation3 + %s41]]
    %s43 = scalar_lea.vmem [#allocation4], %s42
    %v44 = vld [vmem:[%s43] sm:$0x1]
    %s45 = sadd.s32 %s29, 4
    %s46 = sld [smem:[#allocation3 + %s45]]
    %s47 = scalar_lea.vmem [#allocation4], %s46
    %v48 = vld [vmem:[%s47] sm:$0x1]
    %s49 = sadd.s32 %s29, 5
    %s50 = sld [smem:[#allocation3 + %s49]]
    %s51 = scalar_lea.vmem [#allocation4], %s50
    %v52 = vld [vmem:[%s51] sm:$0x1]
    %s53 = sadd.s32 %s29, 6
    %s54 = sld [smem:[#allocation3 + %s53]]
    %s55 = scalar_lea.vmem [#allocation4], %s54
    %v56 = vld [vmem:[%s55] sm:$0x1]
    %s57 = sadd.s32 %s29, 7
    %s58 = sld [smem:[#allocation3 + %s57]]
    %s59 = scalar_lea.vmem [#allocation4], %s58
    %v60 = vld [vmem:[%s59] sm:$0x1]
    %v62 = vlaneseq
    %v63 = vshrl.u32 %v62, 7
    %v64 = vsub.s32 0, %v63
    %v65 = vrot.slane %v36, %v64
    %v68 = vlaneseq
    %v69 = vshrl.u32 %v68, 7
    %v70 = vsub.s32 0, %v69
    %v71 = vrot.slane %v40, %v70
    %v74 = vlaneseq
    %v75 = vshrl.u32 %v74, 7
    %v76 = vsub.s32 0, %v75
    %v77 = vrot.slane %v44, %v76
    %v80 = vlaneseq
    %v81 = vshrl.u32 %v80, 7
    %v82 = vsub.s32 0, %v81
    %v83 = vrot.slane %v48, %v82
    %v86 = vlaneseq
    %v87 = vshrl.u32 %v86, 7
    %v88 = vsub.s32 0, %v87
    %v89 = vrot.slane %v52, %v88
    %v92 = vlaneseq
    %v93 = vshrl.u32 %v92, 7
    %v94 = vsub.s32 0, %v93
    %v95 = vrot.slane %v56, %v94
    %v98 = vlaneseq
    %v99 = vshrl.u32 %v98, 7
    %v100 = vsub.s32 0, %v99
    %v101 = vrot.slane %v60, %v100
    %vm103 = vcmask 1040384
    %v104 = vsel %vm103, %v32, %v65
    %vm105 = vcmask 1041408
    %v106 = vsel %vm105, %v104, %v71
    %vm107 = vcmask 1042432
    %v108 = vsel %vm107, %v106, %v77
    %vm109 = vcmask 1043456
    %v110 = vsel %vm109, %v108, %v83
    %vm111 = vcmask 1044480
    %v112 = vsel %vm111, %v110, %v89
    %vm113 = vcmask 1045504
    %v114 = vsel %vm113, %v112, %v95
    %vm115 = vcmask 1046528
    %v116 = vsel %vm115, %v114, %v101
    %117 = vst [vmem:[#allocation7] sm:$0xff] %v116
    %s118 = sadd.s32 %s28, 8
    %s119 = sld [smem:[#allocation3 + %s118]]
    %s120 = scalar_lea.vmem [#allocation4], %s119
    %v121 = vld [vmem:[%s120] sm:$0x1]
    %s122 = sadd.s32 %s118, 1
    %s123 = sld [smem:[#allocation3 + %s122]]
    %s124 = scalar_lea.vmem [#allocation4], %s123
    %v125 = vld [vmem:[%s124] sm:$0x1]
    %s126 = sadd.s32 %s118, 2
    %s127 = sld [smem:[#allocation3 + %s126]]
    %s128 = scalar_lea.vmem [#allocation4], %s127
    %v129 = vld [vmem:[%s128] sm:$0x1]
    %s130 = sadd.s32 %s118, 3
    %s131 = sld [smem:[#allocation3 + %s130]]
    %s132 = scalar_lea.vmem [#allocation4], %s131
    %v133 = vld [vmem:[%s132] sm:$0x1]
    %s134 = sadd.s32 %s118, 4
    %s135 = sld [smem:[#allocation3 + %s134]]
    %s136 = scalar_lea.vmem [#allocation4], %s135
    %v137 = vld [vmem:[%s136] sm:$0x1]
    %s138 = sadd.s32 %s118, 5
    %s139 = sld [smem:[#allocation3 + %s138]]
    %s140 = scalar_lea.vmem [#allocation4], %s139
    %v141 = vld [vmem:[%s140] sm:$0x1]
    %s142 = sadd.s32 %s118, 6
    %s143 = sld [smem:[#allocation3 + %s142]]
    %s144 = scalar_lea.vmem [#allocation4], %s143
    %v145 = vld [vmem:[%s144] sm:$0x1]
    %s146 = sadd.s32 %s118, 7
    %s147 = sld [smem:[#allocation3 + %s146]]
    %s148 = scalar_lea.vmem [#allocation4], %s147
    %v149 = vld [vmem:[%s148] sm:$0x1]
    %v151 = vlaneseq
    %v152 = vshrl.u32 %v151, 7
    %v153 = vsub.s32 0, %v152
    %v154 = vrot.slane %v125, %v153
    %v157 = vlaneseq
    %v158 = vshrl.u32 %v157, 7
    %v159 = vsub.s32 0, %v158
    %v160 = vrot.slane %v129, %v159
    %v163 = vlaneseq
    %v164 = vshrl.u32 %v163, 7
    %v165 = vsub.s32 0, %v164
    %v166 = vrot.slane %v133, %v165
    %v169 = vlaneseq
    %v170 = vshrl.u32 %v169, 7
    %v171 = vsub.s32 0, %v170
    %v172 = vrot.slane %v137, %v171
    %v175 = vlaneseq
    %v176 = vshrl.u32 %v175, 7
    %v177 = vsub.s32 0, %v176
    %v178 = vrot.slane %v141, %v177
    %v181 = vlaneseq
    %v182 = vshrl.u32 %v181, 7
    %v183 = vsub.s32 0, %v182
    %v184 = vrot.slane %v145, %v183
    %v187 = vlaneseq
    %v188 = vshrl.u32 %v187, 7
    %v189 = vsub.s32 0, %v188
    %v190 = vrot.slane %v149, %v189
    %v192 = vsel %vm103, %v121, %v154
    %v193 = vsel %vm105, %v192, %v160
    %v194 = vsel %vm107, %v193, %v166
    %v195 = vsel %vm109, %v194, %v172
    %v196 = vsel %vm111, %v195, %v178
    %v197 = vsel %vm113, %v196, %v184
    %v198 = vsel %vm115, %v197, %v190
    %s199 = scalar_lea.vmem [#allocation7], 8
    %200 = vst [vmem:[%s199] sm:$0xff] %v198
    // Predicated region
    $region10: #{tpu_custom_call.1} parent=1 // pred_check
      _
    $region11: #{tpu_custom_call.1} parent=1 // pred_check_branch
      %202 = sbr.rel (0) target = $region13
    $region12: #{tpu_custom_call.1} parent=1 // pred_region
      %s204 = ssub.s32 256, 256
      %205 = vsyncadd [#allocation6], %s204
      %s206 = sshll.u32 [#allocation7], 4
      %s207 = int_to_ptr.vmem [resolvable:$true] %s206
      %212 = dma.vmem_to_hbm [thread:$0]  %s207, 256, %s2, [#allocation6], 128, 128, 8
    $region13: #{tpu_custom_call.1} parent=1 // pred_fallthru
      _
    // Predicated region
    $region14: #{tpu_custom_call.1} parent=1 // pred_check
      _
    $region15: #{tpu_custom_call.1} parent=1 // pred_check_branch
      %214 = sbr.rel (0) target = $region17
    $region16: #{tpu_custom_call.1} parent=1 // pred_region
      %215 = dma.done [#allocation6], 256
    $region17: #{tpu_custom_call.1} parent=1 // pred_fallthru
      _
    %216 = vsyncpa [#allocation5], 1
    %217 = vsyncpa [#allocation6], 1

</llo_original>
